<compile_context>
chip_gen: v6e
topology: v6e:2x2x1
jax: 0.10.0
libtpu: 0.0.40
codegen_flags: <defaults>
</compile_context>

<pallas_src>
import jax
import jax.numpy as jnp
from jax.experimental import pallas as pl
from jax.experimental.pallas import tpu as pltpu


# ---------------------------------------------------------------------------
# Kernels
# ---------------------------------------------------------------------------
def _copy_tile_kernel(x_ref, o_ref):
    # Elementwise identity copy of one lane-dense VMEM tile.
    o_ref[...] = x_ref[...]


def _dma_copy_kernel(x_hbm, o_hbm, sem):
    # Direct HBM -> HBM copy: skips HBM->VMEM->vreg->VMEM->HBM entirely.
    cp = pltpu.make_async_copy(x_hbm, o_hbm, sem)
    cp.start()
    cp.wait()


# ---------------------------------------------------------------------------
# Helpers
# ---------------------------------------------------------------------------
def _choose_slab(n_elems):
    """Pick (R, C) with R*C == n, C % 128 == 0, R % 8 == 0 (largest C wins)."""
    for c in (2048, 1024, 512, 256, 128):
        if n_elems % c == 0:
            r = n_elems // c
            if r >= 8 and r % 8 == 0:
                return r, c
    return None


def _tiled_copy(x2d):
    b, f = x2d.shape
    n = b * f
    slab = _choose_slab(n)

    if slab is None:
        # Small / oddly-sized inputs: full-array single block (no (8,128)
        # divisibility constraint applies when block == full array).
        return pl.pallas_call(
            _copy_tile_kernel,
            out_shape=jax.ShapeDtypeStruct((b, f), x2d.dtype),
            grid=(1,),
            in_specs=[pl.BlockSpec((b, f), lambda i: (0, 0))],
            out_specs=pl.BlockSpec((b, f), lambda i: (0, 0)),
        )(x2d)

    r, c = slab
    xs = x2d.reshape(r, c)  # lane-dense slab: full (8,128) vregs, unmasked vst

    # Row-tile sized so one block is <= ~2 MiB: 2 arrays x 2 buffers x 2 MiB
    # = 8 MiB, well under the scoped-VMEM defaults on v5e/v6e/v7x.
    itemsize = jnp.dtype(xs.dtype).itemsize
    tr_cap = max(8, (2 * 1024 * 1024) // (c * itemsize))
    tr = min(r, (tr_cap // 8) * 8)
    while r % tr != 0:  # terminates: r % 8 == 0
        tr -= 8

    out = pl.pallas_call(
        _copy_tile_kernel,
        out_shape=jax.ShapeDtypeStruct((r, c), xs.dtype),
        grid=(r // tr,),
        in_specs=[pl.BlockSpec((tr, c), lambda i: (i, 0))],
        out_specs=pl.BlockSpec((tr, c), lambda i: (i, 0)),
        compiler_params=pltpu.CompilerParams(
            dimension_semantics=("parallel",),      # megacore split on v7x
            vmem_limit_bytes=32 * 1024 * 1024,      # safe on v5e/v6e/v7x
        ),
    )(xs)
    return out.reshape(b, f)


def _dma_copy(x2d):
    b, f = x2d.shape
    return pl.pallas_call(
        _dma_copy_kernel,
        out_shape=jax.ShapeDtypeStruct((b, f), x2d.dtype),
        in_specs=[pl.BlockSpec(memory_space=pl.ANY)],
        out_specs=pl.BlockSpec(memory_space=pl.ANY),
        scratch_shapes=[pltpu.SemaphoreType.DMA],
    )(x2d)


# ---------------------------------------------------------------------------
# Module forward
# ---------------------------------------------------------------------------
def flattened_layer(x: jax.Array, mode: str = "reshape") -> jax.Array:
    """Pallas equivalent of FlattenedLayer.forward: (B, ...) -> (B, prod(rest)).

    mode="reshape": metadata-only, zero HBM traffic (matches torch .view).
    mode="dma"    : materialized copy via a single HBM->HBM DMA.
    mode="tiled"  : materialized copy via a lane-dense pipelined VMEM copy.
    """
    b = x.shape[0]
    f = 1
    for d in x.shape[1:]:
        f *= d
    x2d = x.reshape(b, f)  # row-major flatten == torch .view on contiguous NCHW

    if mode == "reshape":
        return x2d
    if mode == "dma":
        return _dma_copy(x2d)
    if mode == "tiled":
        return _tiled_copy(x2d)
    raise ValueError(f"unknown mode: {mode}")


if __name__ == "__main__":
    key = jax.random.PRNGKey(0)
    # Small NCHW input consistent with the module's usage.
    x = jax.random.normal(key, (2, 4, 16, 16), dtype=jnp.float32)
    ref = x.reshape(x.shape[0], -1)

    y_reshape = flattened_layer(x, mode="reshape")
    y_dma = flattened_layer(x, mode="dma")
    y_tiled = flattened_layer(x, mode="tiled")
    jax.block_until_ready((y_reshape, y_dma, y_tiled))

    for name, y in (("reshape", y_reshape), ("dma", y_dma), ("tiled", y_tiled)):
        assert y.shape == (2, 4 * 16 * 16), (name, y.shape)
        assert bool(jnp.array_equal(y, ref)), f"flatten mismatch ({name})"

    print("KERNEL_OK")
</pallas_src>

<mosaic_0001>
module attributes {stable_mosaic.version = 11 : i64} {
  func.func @_dma_copy_kernel(%arg0: memref<2x1024xf32, #tpu.memory_space<any>>, %arg1: memref<2x1024xf32, #tpu.memory_space<any>>, %arg2: memref<!tpu.dma_semaphore, #tpu.memory_space<semaphore_mem>>) attributes {dimension_semantics = [], scalar_prefetch = 0 : i64, scratch_operands = 1 : i64, tpu.core_type = #tpu.core_type<tc>} {
    tpu.enqueue_dma source(%arg0 : memref<2x1024xf32, #tpu.memory_space<any>>) target(%arg1 : memref<2x1024xf32, #tpu.memory_space<any>>) target_semaphore(%arg2 : memref<!tpu.dma_semaphore, #tpu.memory_space<semaphore_mem>>)
    tpu.wait_dma2 semaphore(%arg2 : memref<!tpu.dma_semaphore, #tpu.memory_space<semaphore_mem>>) src(%arg0 : memref<2x1024xf32, #tpu.memory_space<any>>) dst(%arg1 : memref<2x1024xf32, #tpu.memory_space<any>>)
    return
  }
}

</mosaic_0001>

<llo_original>
// kernel: tpu_custom_call.1
$region0: #{tpu_custom_call.1}
  #allocation0 [shape = 'u32[]', space=smem, size = 0x4, offset = 0x4, fixed_abs, tag = 'smem constant byte address 0x4 - core index']
  #allocation1 [shape = 'u32[144,128]{1,0:T(1,128)}', space=vmem, size = 0x12000, scoped, tag = 'internal scratch']
  #allocation2 [shape = 's32[1]{0}', space=sflag, size = 0x4, scoped, tag = 'scratch operand']
  #allocation3 [shape = 's32[]', space=sflag, size = 0x4, offset = 0, fixed_abs, tag = 'sflag constant byte address 0x0 - dummy sync flag']
  #allocation4 [shape = 'u32[0]{0}', space=smem, size = 0, offset = 0, fixed_abs, tag = 'smem constant byte address 0x0 - null']
  %s0 = inlined_call_operand.hbm [shape: f32[2,1024], index: 0, kind: input, shape index: {}]
  %s1 = inlined_call_operand.hbm [shape: f32[2,1024], index: 1, kind: output, shape index: {}]
  %s2 = sld [smem:[#allocation0]]
  $region2: #{tpu_custom_call.1} parent=0
    _
  %s4 = ssub.s32 1, %s2
  %s5 = scalar_select 0, %s4, %s2
  %s7 = sshll.u32 1, 14
  %s8 = sxor.u32 4294967295, %s7
  %12 = dma.general %s0, 256, %s1, [#allocation2], 131072, [#allocation4], 0, 0
  %s13 = smul.u32 2, 1
  %s14 = smul.u32 %s13, 8
  %s15 = sshll.u32 %s14, 4
  %16 = dma.done [#allocation2], %s15
  %17 = vsyncmov [#allocation2]
  %s18 = vpop.sfrf %17
  %p19 = scmp.eq.s32.totalorder %s18, 0
  %p20 = pneg %p19
  %22 = shalt.err (%p20)

</llo_original>
